<compile_context>
chip_gen: v5e
topology: v5e:2x2
jax: 0.10.0
libtpu: 0.0.40
codegen_flags: <defaults>
</compile_context>

<pallas_src>
import functools

import jax
import jax.numpy as jnp
from jax.experimental import pallas as pl
from jax.experimental.pallas import tpu as pltpu

LANE = 128
SUBLANE = 8


def policy_net_kernel(x_ref, w1_ref, b1_ref, w2p_ref, b2p_ref, o_ref):
    x = x_ref[...]                                     # (tb, S) f32
    tb = x.shape[0]
    state_dim = x.shape[1]
    hidden_dim = w1_ref.shape[1]

    # ---- fc1 + ReLU on the VPU (K = state_dim is tiny; skip the MXU) ------
    h = jnp.broadcast_to(b1_ref[...], (tb, hidden_dim))
    for k in range(state_dim):                         # static unroll (S = 4)
        h = h + x[:, k:k + 1] * w1_ref[k:k + 1, :]
    h = jnp.maximum(h, 0.0)

    # ---- fc2 on the MXU against the lane-padded weight --------------------
    logits = jnp.dot(h, w2p_ref[...], preferred_element_type=jnp.float32)
    logits = logits + b2p_ref[...]                     # padded lanes ~ -1e30

    # ---- numerically-stable softmax over the (lane-dense) action axis -----
    m = jnp.max(logits, axis=1, keepdims=True)
    e = jnp.exp(logits - m)                            # padded lanes -> 0.0
    denom = jnp.sum(e, axis=1, keepdims=True)
    o_ref[...] = (e * pl.reciprocal(denom, approx=True)).astype(o_ref.dtype)


@functools.partial(jax.jit, static_argnames=("block_b",))
def policy_net_forward(x, w1, b1, w2, b2, *, block_b=None):
    B, state_dim = x.shape
    hidden_dim = w1.shape[1]
    action_dim = w2.shape[1]

    # Lane-pad fc2 output dim so the matmul, reduction and store are full-vreg.
    a_pad = ((action_dim + LANE - 1) // LANE) * LANE
    w2p = jnp.pad(w2, ((0, 0), (0, a_pad - action_dim)))               # zeros
    b2p = jnp.pad(b2.reshape(1, action_dim),
                  ((0, 0), (0, a_pad - action_dim)),
                  constant_values=-1e30)                               # exp->0
    b1r = b1.reshape(1, hidden_dim)

    # Batch tile: large (amortize per-step overhead), multiple of 8 sublanes.
    b8 = ((B + SUBLANE - 1) // SUBLANE) * SUBLANE
    if block_b is None:
        block_b = min(1024, b8)
    assert block_b % SUBLANE == 0 or block_b == B
    b_pad = ((B + block_b - 1) // block_b) * block_b
    if b_pad != B:
        x = jnp.pad(x, ((0, b_pad - B), (0, 0)))

    grid = (b_pad // block_b,)
    cost = pl.CostEstimate(
        flops=2 * b_pad * hidden_dim * (state_dim + a_pad),
        transcendentals=b_pad * (a_pad + 1),
        bytes_accessed=4 * (b_pad * state_dim
                            + state_dim * hidden_dim + hidden_dim
                            + hidden_dim * a_pad + a_pad
                            + b_pad * a_pad),
    )

    out = pl.pallas_call(
        policy_net_kernel,
        out_shape=jax.ShapeDtypeStruct((b_pad, a_pad), jnp.float32),
        grid_spec=pltpu.PrefetchScalarGridSpec(
            num_scalar_prefetch=0,
            grid=grid,
            in_specs=[
                # batch tile of inputs
                pl.BlockSpec((block_b, state_dim), lambda i: (i, 0)),
                # grid-invariant weights / biases (constant index_map -> DMA'd
                # once, stay resident in VMEM across batch tiles)
                pl.BlockSpec((state_dim, hidden_dim), lambda i: (0, 0)),
                pl.BlockSpec((1, hidden_dim), lambda i: (0, 0)),
                pl.BlockSpec((hidden_dim, a_pad), lambda i: (0, 0)),
                pl.BlockSpec((1, a_pad), lambda i: (0, 0)),
            ],
            out_specs=pl.BlockSpec((block_b, a_pad), lambda i: (i, 0)),
        ),
        compiler_params=pltpu.CompilerParams(
            dimension_semantics=("parallel",),
        ),
        cost_estimate=cost,
    )(x, w1, b1r, w2p, b2p)

    # Strip batch padding and the lane padding of the action dimension.
    return out[:B, :action_dim]


def init_params(key, state_dim, hidden_dim, action_dim):
    """Deterministic init mimicking torch.nn.Linear (uniform +/- 1/sqrt(fan_in))."""
    k1, k2, k3, k4 = jax.random.split(key, 4)
    bound1 = 1.0 / jnp.sqrt(state_dim)
    bound2 = 1.0 / jnp.sqrt(hidden_dim)
    # stored as [in, out] (transposed vs. torch's [out, in])
    w1 = jax.random.uniform(k1, (state_dim, hidden_dim), jnp.float32, -bound1, bound1)
    b1 = jax.random.uniform(k2, (hidden_dim,), jnp.float32, -bound1, bound1)
    w2 = jax.random.uniform(k3, (hidden_dim, action_dim), jnp.float32, -bound2, bound2)
    b2 = jax.random.uniform(k4, (action_dim,), jnp.float32, -bound2, bound2)
    return w1, b1, w2, b2


def reference_forward(x, w1, b1, w2, b2):
    h = jnp.maximum(x @ w1 + b1, 0.0)
    logits = h @ w2 + b2
    return jax.nn.softmax(logits, axis=1)


if __name__ == "__main__":
    # CartPole-v1: state_dim=4, action_dim=2; hidden_dim=128 as in the module.
    B, state_dim, hidden_dim, action_dim = 8, 4, 128, 2

    key = jax.random.PRNGKey(0)
    kx, kp = jax.random.split(key)
    x = jax.random.normal(kx, (B, state_dim), jnp.float32)
    w1, b1, w2, b2 = init_params(kp, state_dim, hidden_dim, action_dim)

    out = policy_net_forward(x, w1, b1, w2, b2)
    out = jax.block_until_ready(out)

    ref = reference_forward(x, w1, b1, w2, b2)
    assert out.shape == (B, action_dim)
    # approx reciprocal (EUP) -> rows sum to 1 only to ~1e-3.
    assert jnp.allclose(out, ref, atol=2e-3, rtol=2e-3)
    assert jnp.allclose(jnp.sum(out, axis=1), 1.0, atol=2e-3)

    print("KERNEL_OK")
</pallas_src>

<mosaic_0001>
module attributes {stable_mosaic.version = 11 : i64} {
  func.func @policy_net_kernel(%arg0: i32, %arg1: memref<8x4xf32, #tpu.memory_space<vmem>>, %arg2: memref<4x128xf32, #tpu.memory_space<vmem>>, %arg3: memref<1x128xf32, #tpu.memory_space<vmem>>, %arg4: memref<128x128xf32, #tpu.memory_space<vmem>>, %arg5: memref<1x128xf32, #tpu.memory_space<vmem>>, %arg6: memref<8x128xf32, #tpu.memory_space<vmem>>) attributes {dimension_semantics = [#tpu.dimension_semantics<parallel>], iteration_bounds = array<i64: 1>, scalar_prefetch = 0 : i64, scratch_operands = 0 : i64, tpu.core_type = #tpu.core_type<tc>, window_params = [{transform_indices = @transform_0, window_bounds = array<i64: 8, 4>}, {pipeline_mode = #tpu.pipeline_mode<synchronous>, transform_indices = @transform_1, window_bounds = array<i64: 4, 128>}, {pipeline_mode = #tpu.pipeline_mode<synchronous>, transform_indices = @transform_2, window_bounds = array<i64: 1, 128>}, {pipeline_mode = #tpu.pipeline_mode<synchronous>, transform_indices = @transform_3, window_bounds = array<i64: 128, 128>}, {pipeline_mode = #tpu.pipeline_mode<synchronous>, transform_indices = @transform_4, window_bounds = array<i64: 1, 128>}, {transform_indices = @transform_5, window_bounds = array<i64: 8, 128>}]} {
    %c0 = arith.constant 0 : index
    %c0_0 = arith.constant 0 : index
    %0 = vector.load %arg1[%c0, %c0_0] : memref<8x4xf32, #tpu.memory_space<vmem>>, vector<8x4xf32>
    %c0_1 = arith.constant 0 : index
    %c0_2 = arith.constant 0 : index
    %1 = vector.load %arg3[%c0_1, %c0_2] : memref<1x128xf32, #tpu.memory_space<vmem>>, vector<1x128xf32>
    %2 = vector.shape_cast %1 : vector<1x128xf32> to vector<1x128xf32>
    %3 = vector.broadcast %2 : vector<1x128xf32> to vector<8x128xf32>
    %4 = vector.extract_strided_slice %0 {offsets = [0, 0], sizes = [8, 1], strides = [1, 1]} : vector<8x4xf32> to vector<8x1xf32>
    %c0_3 = arith.constant 0 : index
    %c0_4 = arith.constant 0 : index
    %5 = vector.load %arg2[%c0_3, %c0_4] : memref<4x128xf32, #tpu.memory_space<vmem>>, vector<1x128xf32>
    %6 = vector.broadcast %4 : vector<8x1xf32> to vector<8x128xf32>
    %7 = vector.broadcast %5 : vector<1x128xf32> to vector<8x128xf32>
    %8 = arith.mulf %6, %7 : vector<8x128xf32>
    %9 = arith.addf %3, %8 : vector<8x128xf32>
    %10 = vector.extract_strided_slice %0 {offsets = [0, 1], sizes = [8, 1], strides = [1, 1]} : vector<8x4xf32> to vector<8x1xf32>
    %c1 = arith.constant 1 : index
    %c0_5 = arith.constant 0 : index
    %11 = vector.load %arg2[%c1, %c0_5] : memref<4x128xf32, #tpu.memory_space<vmem>>, vector<1x128xf32>
    %12 = vector.broadcast %10 : vector<8x1xf32> to vector<8x128xf32>
    %13 = vector.broadcast %11 : vector<1x128xf32> to vector<8x128xf32>
    %14 = arith.mulf %12, %13 : vector<8x128xf32>
    %15 = arith.addf %9, %14 : vector<8x128xf32>
    %16 = vector.extract_strided_slice %0 {offsets = [0, 2], sizes = [8, 1], strides = [1, 1]} : vector<8x4xf32> to vector<8x1xf32>
    %c2 = arith.constant 2 : index
    %c0_6 = arith.constant 0 : index
    %17 = vector.load %arg2[%c2, %c0_6] : memref<4x128xf32, #tpu.memory_space<vmem>>, vector<1x128xf32>
    %18 = vector.broadcast %16 : vector<8x1xf32> to vector<8x128xf32>
    %19 = vector.broadcast %17 : vector<1x128xf32> to vector<8x128xf32>
    %20 = arith.mulf %18, %19 : vector<8x128xf32>
    %21 = arith.addf %15, %20 : vector<8x128xf32>
    %22 = vector.extract_strided_slice %0 {offsets = [0, 3], sizes = [8, 1], strides = [1, 1]} : vector<8x4xf32> to vector<8x1xf32>
    %c3 = arith.constant 3 : index
    %c0_7 = arith.constant 0 : index
    %23 = vector.load %arg2[%c3, %c0_7] : memref<4x128xf32, #tpu.memory_space<vmem>>, vector<1x128xf32>
    %24 = vector.broadcast %22 : vector<8x1xf32> to vector<8x128xf32>
    %25 = vector.broadcast %23 : vector<1x128xf32> to vector<8x128xf32>
    %26 = arith.mulf %24, %25 : vector<8x128xf32>
    %27 = arith.addf %21, %26 : vector<8x128xf32>
    %cst = arith.constant 0.000000e+00 : f32
    %28 = vector.broadcast %cst : f32 to vector<8x128xf32>
    %29 = arith.maximumf %27, %28 : vector<8x128xf32>
    %c0_8 = arith.constant 0 : index
    %c0_9 = arith.constant 0 : index
    %30 = vector.load %arg4[%c0_8, %c0_9] : memref<128x128xf32, #tpu.memory_space<vmem>>, vector<128x128xf32>
    %cst_10 = arith.constant dense<0.000000e+00> : vector<8x128xf32>
    %31 = tpu.matmul %29, %30, %cst_10 {dimension_numbers = #tpu.dot_dimension_numbers<[1], [0], [0], [1], [0, 0, 1, 1], [], []>} : vector<8x128xf32>, vector<128x128xf32>, vector<8x128xf32> -> vector<8x128xf32>
    %c0_11 = arith.constant 0 : index
    %c0_12 = arith.constant 0 : index
    %32 = vector.load %arg5[%c0_11, %c0_12] : memref<1x128xf32, #tpu.memory_space<vmem>>, vector<1x128xf32>
    %33 = vector.broadcast %32 : vector<1x128xf32> to vector<8x128xf32>
    %34 = arith.addf %31, %33 : vector<8x128xf32>
    %cst_13 = arith.constant dense<0xFF800000> : vector<8xf32>
    %35 = vector.multi_reduction <maximumf>, %34, %cst_13 [1] : vector<8x128xf32> to vector<8xf32>
    %36 = vector.shape_cast %35 : vector<8xf32> to vector<8x1xf32>
    %37 = vector.broadcast %36 : vector<8x1xf32> to vector<8x128xf32>
    %38 = arith.subf %34, %37 : vector<8x128xf32>
    %39 = math.exp %38 : vector<8x128xf32>
    %cst_14 = arith.constant dense<0.000000e+00> : vector<8xf32>
    %40 = vector.multi_reduction <add>, %39, %cst_14 [1] : vector<8x128xf32> to vector<8xf32>
    %41 = vector.shape_cast %40 : vector<8xf32> to vector<8x1xf32>
    %42 = tpu.reciprocal %41 {approx = true} : vector<8x1xf32> -> vector<8x1xf32>
    %43 = vector.broadcast %42 : vector<8x1xf32> to vector<8x128xf32>
    %44 = arith.mulf %39, %43 : vector<8x128xf32>
    %c0_15 = arith.constant 0 : index
    %c0_16 = arith.constant 0 : index
    %45 = vector.load %arg6[%c0_15, %c0_16] : memref<8x128xf32, #tpu.memory_space<vmem>>, vector<8x128xf32>
    tpu.vector_store %arg6[%c0_15, %c0_16], %44 {strides = array<i32>} : memref<8x128xf32, #tpu.memory_space<vmem>>, vector<8x128xf32>,
    return
  }
  func.func @transform_0(%arg0: i32) -> (i32, i32) {
    %c0_i32 = arith.constant 0 : i32
    %c0_i32_0 = arith.constant 0 : i32
    return %arg0, %c0_i32 : i32, i32
  }
  func.func @transform_1(%arg0: i32) -> (i32, i32) {
    %c0_i32 = arith.constant 0 : i32
    %c0_i32_0 = arith.constant 0 : i32
    %c0_i32_1 = arith.constant 0 : i32
    return %c0_i32, %c0_i32_0 : i32, i32
  }
  func.func @transform_2(%arg0: i32) -> (i32, i32) {
    %c0_i32 = arith.constant 0 : i32
    %c0_i32_0 = arith.constant 0 : i32
    %c0_i32_1 = arith.constant 0 : i32
    return %c0_i32, %c0_i32_0 : i32, i32
  }
  func.func @transform_3(%arg0: i32) -> (i32, i32) {
    %c0_i32 = arith.constant 0 : i32
    %c0_i32_0 = arith.constant 0 : i32
    %c0_i32_1 = arith.constant 0 : i32
    return %c0_i32, %c0_i32_0 : i32, i32
  }
  func.func @transform_4(%arg0: i32) -> (i32, i32) {
    %c0_i32 = arith.constant 0 : i32
    %c0_i32_0 = arith.constant 0 : i32
    %c0_i32_1 = arith.constant 0 : i32
    return %c0_i32, %c0_i32_0 : i32, i32
  }
  func.func @transform_5(%arg0: i32) -> (i32, i32) {
    %c0_i32 = arith.constant 0 : i32
    %c0_i32_0 = arith.constant 0 : i32
    return %arg0, %c0_i32 : i32, i32
  }
}

</mosaic_0001>

<llo_original>
// kernel: policy_net_forward.1
$region0: #{policy_net_forward.1}
  #allocation0 [shape = 'u32[]', space=smem, size = 0x4, offset = 0x4, fixed_abs, tag = 'smem constant byte address 0x4 - core index']
  #allocation1 [shape = 'u32[72,128]{1,0:T(1,128)}', space=vmem, size = 0x9000, scoped, tag = 'internal scratch']
  %s0 = inlined_call_operand.vmem [shape: f32[8,4], index: 0, kind: input, shape index: {}]
  %s1 = inlined_call_operand.vmem [shape: f32[4,128], index: 1, kind: input, shape index: {}]
  %s2 = inlined_call_operand.vmem [shape: f32[1,128], index: 2, kind: input, shape index: {}]
  %s3 = inlined_call_operand.vmem [shape: f32[128,128], index: 3, kind: input, shape index: {}]
  %s4 = inlined_call_operand.vmem [shape: f32[1,128], index: 4, kind: input, shape index: {}]
  %s5 = inlined_call_operand.vmem [shape: f32[8,128], index: 5, kind: output, shape index: {}]
  %s6 = sld [smem:[#allocation0]]
  $region30: #{policy_net_forward.1} parent=0
    _
  %s8 = ssub.s32 1, %s6
  %s9 = scalar_select 0, %s8, %s6
  // Predicated region
  $region2: #{policy_net_forward.1} parent=0 // pred_check
    _
  $region3: #{policy_net_forward.1} parent=0 // pred_check_branch
    %11 = sbr.rel (0) target = $region5
  $region4: #{policy_net_forward.1} parent=0 // pred_region
    _
  $region5: #{policy_net_forward.1} parent=0 // pred_fallthru
    _
  // Predicated region
  $region6: #{policy_net_forward.1} parent=0 // pred_check
    _
  $region7: #{policy_net_forward.1} parent=0 // pred_check_branch
    %13 = sbr.rel (0) target = $region9
  $region8: #{policy_net_forward.1} parent=0 // pred_region
    _
  $region9: #{policy_net_forward.1} parent=0 // pred_fallthru
    _
  // Predicated region
  $region10: #{policy_net_forward.1} parent=0 // pred_check
    _
  $region11: #{policy_net_forward.1} parent=0 // pred_check_branch
    %15 = sbr.rel (0) target = $region13
  $region12: #{policy_net_forward.1} parent=0 // pred_region
    _
  $region13: #{policy_net_forward.1} parent=0 // pred_fallthru
    _
  // Predicated region
  $region14: #{policy_net_forward.1} parent=0 // pred_check
    _
  $region15: #{policy_net_forward.1} parent=0 // pred_check_branch
    %17 = sbr.rel (0) target = $region17
  $region16: #{policy_net_forward.1} parent=0 // pred_region
    _
  $region17: #{policy_net_forward.1} parent=0 // pred_fallthru
    _
  // Predicated region
  $region18: #{policy_net_forward.1} parent=0 // pred_check
    _
  $region19: #{policy_net_forward.1} parent=0 // pred_check_branch
    %19 = sbr.rel (0) target = $region21
  $region20: #{policy_net_forward.1} parent=0 // pred_region
    _
  $region21: #{policy_net_forward.1} parent=0 // pred_fallthru
    _
  %v20 = vld [vmem:[%s0] sm:$0xff]
  %v21 = vld [vmem:[%s2] sm:$0x1]
  %v23 = vperm.slane %v21, 0
  %v25 = vld [vmem:[%s1] sm:$0x1]
  %27 = vset.pattern.permute.xlu0 0
  %28 = vperm.xlu0 %27, %v20
  %v29 = vpop.permute.xlu0 %28
  %v31 = vperm.slane %v25, 0
  %v32 = vmul.f32 %v29, %v31
  %v33 = vadd.f32 %v23, %v32
  %v34 = vld [vmem:[%s1 + $0x1] sm:$0x1]
  %35 = vset.pattern.permute.xlu0 1
  %36 = vperm.xlu0 %35, %v20
  %v37 = vpop.permute.xlu0 %36
  %v39 = vperm.slane %v34, 0
  %v40 = vmul.f32 %v37, %v39
  %v41 = vadd.f32 %v33, %v40
  %v42 = vld [vmem:[%s1 + $0x2] sm:$0x1]
  %43 = vset.pattern.permute.xlu0 2
  %44 = vperm.xlu0 %43, %v20
  %v45 = vpop.permute.xlu0 %44
  %v47 = vperm.slane %v42, 0
  %v48 = vmul.f32 %v45, %v47
  %v49 = vadd.f32 %v41, %v48
  %v50 = vld [vmem:[%s1 + $0x3] sm:$0x1]
  %51 = vset.pattern.permute.xlu0 3
  %52 = vperm.xlu0 %51, %v20
  %v53 = vpop.permute.xlu0 %52
  %v55 = vperm.slane %v50, 0
  %v56 = vmul.f32 %v53, %v55
  %v57 = vadd.f32 %v49, %v56
  %v58 = vmax.f32 %v57, 0.0
  %v59 = vld [vmem:[%s3] sm:$0xff]
  %v60 = vld [vmem:[%s3 + $0x8] sm:$0xff]
  %v61 = vld [vmem:[%s3 + $0x10] sm:$0xff]
  %v62 = vld [vmem:[%s3 + $0x18] sm:$0xff]
  %v63 = vld [vmem:[%s3 + $0x20] sm:$0xff]
  %v64 = vld [vmem:[%s3 + $0x28] sm:$0xff]
  %v65 = vld [vmem:[%s3 + $0x30] sm:$0xff]
  %v66 = vld [vmem:[%s3 + $0x38] sm:$0xff]
  %v67 = vld [vmem:[%s3 + $0x40] sm:$0xff]
  %v68 = vld [vmem:[%s3 + $0x48] sm:$0xff]
  %v69 = vld [vmem:[%s3 + $0x50] sm:$0xff]
  %v70 = vld [vmem:[%s3 + $0x58] sm:$0xff]
  %v71 = vld [vmem:[%s3 + $0x60] sm:$0xff]
  %v72 = vld [vmem:[%s3 + $0x68] sm:$0xff]
  %v73 = vld [vmem:[%s3 + $0x70] sm:$0xff]
  %v74 = vld [vmem:[%s3 + $0x78] sm:$0xff]
  %v75 = vld [vmem:[%s4] sm:$0x1]
  %v77 = vperm.slane %v75, 0
  %79 = vmatpush.msra.mxu0 %v74
  %80 = vmatpush.msra.mxu0 %v73
  %81 = vmatpush.msra.mxu0 %v72
  %82 = vmatpush.msra.mxu0 %v71
  %83 = vmatpush.msra.mxu0 %v70
  %84 = vmatpush.msra.mxu0 %v69
  %85 = vmatpush.msra.mxu0 %v68
  %86 = vmatpush.msra.mxu0 %v67
  %87 = vmatpush.msra.mxu0 %v66
  %88 = vmatpush.msra.mxu0 %v65
  %89 = vmatpush.msra.mxu0 %v64
  %90 = vmatpush.msra.mxu0 %v63
  %91 = vmatpush.msra.mxu0 %v62
  %92 = vmatpush.msra.mxu0 %v61
  %93 = vmatpush.msra.mxu0 %v60
  %94 = vmatpush.msra.mxu0 %v59
  %95 = vmatmul.f32.gmra.mxu0 %v58
  %v96 = vpop.f32.mrf.mxu0
  %v97 = vadd.f32 %v77, %v96
  %98 = vdwg.mxu0
  %99 = vmax.xlane.f32.xlu0 %v97
  %v100 = vpop.xlane.xlu0 %99
  %v101 = vsub.f32 %v97, %v100
  %v102 = vmul.f32 %v101, 1.442695
  %v103 = vpow.pop %v102
  %104 = vadd.xlane.f32.xlu0 %v103
  %v105 = vpop.xlane.xlu0 %104
  %v106 = vrcp.pop %v105
  %v107 = vmul.f32 %v103, %v106
  %108 = vst [vmem:[%s5] sm:$0xff] %v107
  // Predicated region
  $region22: #{policy_net_forward.1} parent=0 // pred_check
    _
  $region23: #{policy_net_forward.1} parent=0 // pred_check_branch
    %110 = sbr.rel (0) target = $region25
  $region24: #{policy_net_forward.1} parent=0 // pred_region
    _
  $region25: #{policy_net_forward.1} parent=0 // pred_fallthru
    _
  // Predicated region
  $region26: #{policy_net_forward.1} parent=0 // pred_check
    _
  $region27: #{policy_net_forward.1} parent=0 // pred_check_branch
    %112 = sbr.rel (0) target = $region29
  $region28: #{policy_net_forward.1} parent=0 // pred_region
    _
  $region29: #{policy_net_forward.1} parent=0 // pred_fallthru
    _

</llo_original>
